<compile_context>
chip_gen: v5e
topology: v5e:2x2
jax: 0.10.0
libtpu: 0.0.40
codegen_flags: <defaults>
</compile_context>

<pallas_src>
import functools
from typing import NamedTuple

import jax
import jax.numpy as jnp
from jax.experimental import pallas as pl
from jax.experimental.pallas import tpu as pltpu


LANE = 128       # TPU lane width (last dim)
SUBLANE = 8      # TPU sublane width (second-to-last dim)

# Conservative streaming-VMEM budget for the double-buffered x / out tiles.
# Stays well under even v5e's 16 MiB scoped-VMEM default.
_VMEM_STREAM_BUDGET = 12 * 1024 * 1024
_MAX_TB = 4096   # cap on tile height (footprint ~4.5 MiB at S=16, A_pad=128)


def _round_up(x, m):
    return ((x + m - 1) // m) * m


def _cdiv(a, b):
    return -(-a // b)


class QNetworkParams(NamedTuple):
    """Kernel-ready parameters (cast / padded / reshaped once, off the hot path)."""
    w1: jax.Array   # [S, H]      bf16
    b1: jax.Array   # [1, H]      f32
    w2: jax.Array   # [H, A_pad]  f32 (zero-padded to a lane multiple)
    b2: jax.Array   # [1, A_pad]  f32 (zero-padded to a lane multiple)


def prepare_params(w1, b1, w2, b2):
    """One-time prep: bf16 W1, f32 (1,H)/(1,A_pad) biases, lane-padded W2/b2."""
    S, H = w1.shape
    H2, A = w2.shape
    assert H == H2
    A_pad = _round_up(A, LANE)
    w2_p = w2 if A_pad == A else jnp.pad(w2, ((0, 0), (0, A_pad - A)))
    b2_p = b2 if A_pad == A else jnp.pad(b2, (0, A_pad - A))
    return QNetworkParams(
        w1=w1.astype(jnp.bfloat16),
        b1=b1.reshape(1, H).astype(jnp.float32),
        w2=w2_p.astype(jnp.float32),
        b2=b2_p.reshape(1, A_pad).astype(jnp.float32),
    )


def _choose_batch_tiling(B, S, A_pad):
    """Pick (tile_rows, n_tiles, padded_batch) for the batch grid axis."""
    B_pad8 = _round_up(B, SUBLANE)
    # Per-row streaming VMEM: double-buffered f32 x tile + double-buffered f32 out tile.
    bytes_per_row = 2 * S * 4 + 2 * A_pad * 4
    max_tb = (_VMEM_STREAM_BUDGET // bytes_per_row) // SUBLANE * SUBLANE
    max_tb = max(SUBLANE, min(max_tb, _MAX_TB))
    if B_pad8 <= 2 * SUBLANE:
        # Tiny batch: single tile; nothing useful for a second TensorCore anyway.
        return B_pad8, 1, B_pad8
    # >= 2 tiles and an even count so v7x's two TensorCores both get work.
    n_tiles = max(2, _cdiv(B_pad8, max_tb))
    n_tiles += n_tiles % 2
    tb = _round_up(_cdiv(B_pad8, n_tiles), SUBLANE)
    n_tiles = _cdiv(B_pad8, tb)
    n_tiles += n_tiles % 2
    return tb, n_tiles, n_tiles * tb


def qnet_kernel(x_ref, w1_ref, b1_ref, w2_ref, b2_ref, o_ref):
    # First Linear: bf16 operands into the MXU, explicit f32 accumulation.
    x = x_ref[...].astype(jnp.bfloat16)          # in-kernel cast: rides VALU slack
    h = jnp.dot(x, w1_ref[...], preferred_element_type=jnp.float32)
    h = h + b1_ref[...]                          # (1, H) f32 broadcasts over batch rows
    h = jnp.maximum(h, 0.01 * h)                 # nn.LeakyReLU default slope = 0.01
    # Second Linear fully in f32 (parity with the f32 reference; MXU has slack).
    out = jnp.dot(h, w2_ref[...], preferred_element_type=jnp.float32)
    o_ref[...] = out + b2_ref[...]               # lane-dense (TB, A_pad) f32 store


@functools.partial(jax.jit, static_argnames=("action_dim", "unpad"))
def qnetwork_forward(state, params: QNetworkParams, *, action_dim, unpad=True):
    """state: [B, state_dim] f32; params from prepare_params()."""
    B, S = state.shape
    H = params.w1.shape[1]
    A_pad = params.w2.shape[1]
    assert action_dim <= A_pad

    TB, n_tiles, B_pad = _choose_batch_tiling(B, S, A_pad)

    x = state.astype(jnp.float32)
    if B_pad != B:
        x = jnp.pad(x, ((0, B_pad - B), (0, 0)))

    flops = 2 * B_pad * (S * H + H * A_pad)
    bytes_accessed = (B_pad * S * 4            # f32 x
                      + S * H * 2 + H * 4      # bf16 W1, f32 b1
                      + H * A_pad * 4 + A_pad * 4  # f32 W2, b2
                      + B_pad * A_pad * 4)     # f32 output

    out = pl.pallas_call(
        qnet_kernel,
        out_shape=jax.ShapeDtypeStruct((B_pad, A_pad), jnp.float32),
        grid_spec=pltpu.PrefetchScalarGridSpec(
            num_scalar_prefetch=0,
            grid=(n_tiles,),
            in_specs=[
                pl.BlockSpec((TB, S), lambda i: (i, 0)),       # x streams over batch
                pl.BlockSpec((S, H), lambda i: (0, 0)),        # W1 resident (bf16)
                pl.BlockSpec((1, H), lambda i: (0, 0)),        # b1 resident (f32)
                pl.BlockSpec((H, A_pad), lambda i: (0, 0)),    # W2 resident (f32)
                pl.BlockSpec((1, A_pad), lambda i: (0, 0)),    # b2 resident (f32)
            ],
            out_specs=pl.BlockSpec((TB, A_pad), lambda i: (i, 0)),
        ),
        compiler_params=pltpu.CompilerParams(
            dimension_semantics=("parallel",),   # batch axis shards across v7x's 2 TCs
        ),
        cost_estimate=pl.CostEstimate(
            flops=flops, transcendentals=0, bytes_accessed=bytes_accessed),
    )(x, params.w1, params.b1, params.w2, params.b2)

    if not unpad:
        return out                    # padded (B_pad, A_pad) slab; skips slice HLO
    return out[:B, :action_dim]


def init_params(key, state_dim, action_dim, hidden_dim):
    """Deterministic synthetic params (PyTorch-style uniform fan-in ranges)."""
    k1, k2, k3, k4 = jax.random.split(key, 4)
    lim1 = 1.0 / (state_dim ** 0.5)
    lim2 = 1.0 / (hidden_dim ** 0.5)
    w1 = jax.random.uniform(k1, (state_dim, hidden_dim), jnp.float32, -lim1, lim1)
    b1 = jax.random.uniform(k2, (hidden_dim,), jnp.float32, -lim1, lim1)
    w2 = jax.random.uniform(k3, (hidden_dim, action_dim), jnp.float32, -lim2, lim2)
    b2 = jax.random.uniform(k4, (action_dim,), jnp.float32, -lim2, lim2)
    return w1, b1, w2, b2


def _reference_f32(state, w1, b1, w2, b2):
    h = state @ w1 + b1
    h = jnp.where(h > 0, h, 0.01 * h)
    return h @ w2 + b2


if __name__ == "__main__":
    key = jax.random.PRNGKey(0)
    state_dim, action_dim, hidden_dim = 16, 4, 128   # hidden_dims=[128] default
    k_params, k_s1, k_s2, k_s3 = jax.random.split(key, 4)
    w1, b1, w2, b2 = init_params(k_params, state_dim, action_dim, hidden_dim)
    params = prepare_params(w1, b1, w2, b2)          # one-time prep, off hot path

    ok = True

    # Case 1: batch big enough for a 2-tile grid (one tile per v7x TensorCore).
    batch = 512
    state = jax.random.normal(k_s1, (batch, state_dim), jnp.float32)
    out = jax.block_until_ready(qnetwork_forward(state, params, action_dim=action_dim))
    assert out.shape == (batch, action_dim)
    ok &= bool(jnp.allclose(out, _reference_f32(state, w1, b1, w2, b2),
                            atol=2e-2, rtol=2e-2))

    # Case 2: tiny batch (single 8-row tile).
    batch2 = 8
    state2 = jax.random.normal(k_s2, (batch2, state_dim), jnp.float32)
    out2 = jax.block_until_ready(qnetwork_forward(state2, params, action_dim=action_dim))
    assert out2.shape == (batch2, action_dim)
    ok &= bool(jnp.allclose(out2, _reference_f32(state2, w1, b1, w2, b2),
                            atol=2e-2, rtol=2e-2))

    # Padded-slab path (skips the trailing slice HLO).
    out2_pad = jax.block_until_ready(
        qnetwork_forward(state2, params, action_dim=action_dim, unpad=False))
    assert out2_pad.shape[1] % LANE == 0
    ok &= bool(jnp.allclose(out2_pad[:batch2, :action_dim], out2, atol=0, rtol=0))

    # Case 3: unaligned batch — only sublane-level padding (no 256-row rounding).
    batch3 = 264
    state3 = jax.random.normal(k_s3, (batch3, state_dim), jnp.float32)
    out3 = jax.block_until_ready(qnetwork_forward(state3, params, action_dim=action_dim))
    assert out3.shape == (batch3, action_dim)
    ok &= bool(jnp.allclose(out3, _reference_f32(state3, w1, b1, w2, b2),
                            atol=2e-2, rtol=2e-2))

    assert ok
    print("KERNEL_OK")
</pallas_src>

<mosaic_0001>
module attributes {stable_mosaic.version = 11 : i64} {
  func.func @qnet_kernel(%arg0: i32, %arg1: memref<256x16xf32, #tpu.memory_space<vmem>>, %arg2: memref<16x128xbf16, #tpu.memory_space<vmem>>, %arg3: memref<1x128xf32, #tpu.memory_space<vmem>>, %arg4: memref<128x128xf32, #tpu.memory_space<vmem>>, %arg5: memref<1x128xf32, #tpu.memory_space<vmem>>, %arg6: memref<256x128xf32, #tpu.memory_space<vmem>>) attributes {dimension_semantics = [#tpu.dimension_semantics<parallel>], iteration_bounds = array<i64: 2>, scalar_prefetch = 0 : i64, scratch_operands = 0 : i64, tpu.core_type = #tpu.core_type<tc>, window_params = [{transform_indices = @transform_0, window_bounds = array<i64: 256, 16>}, {pipeline_mode = #tpu.pipeline_mode<synchronous>, transform_indices = @transform_1, window_bounds = array<i64: 16, 128>}, {pipeline_mode = #tpu.pipeline_mode<synchronous>, transform_indices = @transform_2, window_bounds = array<i64: 1, 128>}, {pipeline_mode = #tpu.pipeline_mode<synchronous>, transform_indices = @transform_3, window_bounds = array<i64: 128, 128>}, {pipeline_mode = #tpu.pipeline_mode<synchronous>, transform_indices = @transform_4, window_bounds = array<i64: 1, 128>}, {transform_indices = @transform_5, window_bounds = array<i64: 256, 128>}]} {
    %c0 = arith.constant 0 : index
    %c0_0 = arith.constant 0 : index
    %0 = vector.load %arg1[%c0, %c0_0] : memref<256x16xf32, #tpu.memory_space<vmem>>, vector<256x16xf32>
    %1 = arith.truncf %0 : vector<256x16xf32> to vector<256x16xbf16>
    %c0_1 = arith.constant 0 : index
    %c0_2 = arith.constant 0 : index
    %2 = vector.load %arg2[%c0_1, %c0_2] : memref<16x128xbf16, #tpu.memory_space<vmem>>, vector<16x128xbf16>
    %cst = arith.constant dense<0.000000e+00> : vector<256x128xf32>
    %3 = tpu.matmul %1, %2, %cst {dimension_numbers = #tpu.dot_dimension_numbers<[1], [0], [0], [1], [0, 0, 1, 1], [], []>} : vector<256x16xbf16>, vector<16x128xbf16>, vector<256x128xf32> -> vector<256x128xf32>
    %c0_3 = arith.constant 0 : index
    %c0_4 = arith.constant 0 : index
    %4 = vector.load %arg3[%c0_3, %c0_4] : memref<1x128xf32, #tpu.memory_space<vmem>>, vector<1x128xf32>
    %5 = vector.broadcast %4 : vector<1x128xf32> to vector<256x128xf32>
    %6 = arith.addf %3, %5 : vector<256x128xf32>
    %cst_5 = arith.constant 0.00999999977 : f32
    %7 = vector.broadcast %cst_5 : f32 to vector<256x128xf32>
    %8 = arith.mulf %7, %6 : vector<256x128xf32>
    %9 = arith.maximumf %6, %8 : vector<256x128xf32>
    %c0_6 = arith.constant 0 : index
    %c0_7 = arith.constant 0 : index
    %10 = vector.load %arg4[%c0_6, %c0_7] : memref<128x128xf32, #tpu.memory_space<vmem>>, vector<128x128xf32>
    %cst_8 = arith.constant dense<0.000000e+00> : vector<256x128xf32>
    %11 = tpu.matmul %9, %10, %cst_8 {dimension_numbers = #tpu.dot_dimension_numbers<[1], [0], [0], [1], [0, 0, 1, 1], [], []>} : vector<256x128xf32>, vector<128x128xf32>, vector<256x128xf32> -> vector<256x128xf32>
    %c0_9 = arith.constant 0 : index
    %c0_10 = arith.constant 0 : index
    %12 = vector.load %arg5[%c0_9, %c0_10] : memref<1x128xf32, #tpu.memory_space<vmem>>, vector<1x128xf32>
    %13 = vector.broadcast %12 : vector<1x128xf32> to vector<256x128xf32>
    %14 = arith.addf %11, %13 : vector<256x128xf32>
    %c0_11 = arith.constant 0 : index
    %c0_12 = arith.constant 0 : index
    %15 = vector.load %arg6[%c0_11, %c0_12] : memref<256x128xf32, #tpu.memory_space<vmem>>, vector<256x128xf32>
    tpu.vector_store %arg6[%c0_11, %c0_12], %14 {strides = array<i32>} : memref<256x128xf32, #tpu.memory_space<vmem>>, vector<256x128xf32>,
    return
  }
  func.func @transform_0(%arg0: i32) -> (i32, i32) {
    %c0_i32 = arith.constant 0 : i32
    %c0_i32_0 = arith.constant 0 : i32
    return %arg0, %c0_i32 : i32, i32
  }
  func.func @transform_1(%arg0: i32) -> (i32, i32) {
    %c0_i32 = arith.constant 0 : i32
    %c0_i32_0 = arith.constant 0 : i32
    %c0_i32_1 = arith.constant 0 : i32
    return %c0_i32, %c0_i32_0 : i32, i32
  }
  func.func @transform_2(%arg0: i32) -> (i32, i32) {
    %c0_i32 = arith.constant 0 : i32
    %c0_i32_0 = arith.constant 0 : i32
    %c0_i32_1 = arith.constant 0 : i32
    return %c0_i32, %c0_i32_0 : i32, i32
  }
  func.func @transform_3(%arg0: i32) -> (i32, i32) {
    %c0_i32 = arith.constant 0 : i32
    %c0_i32_0 = arith.constant 0 : i32
    %c0_i32_1 = arith.constant 0 : i32
    return %c0_i32, %c0_i32_0 : i32, i32
  }
  func.func @transform_4(%arg0: i32) -> (i32, i32) {
    %c0_i32 = arith.constant 0 : i32
    %c0_i32_0 = arith.constant 0 : i32
    %c0_i32_1 = arith.constant 0 : i32
    return %c0_i32, %c0_i32_0 : i32, i32
  }
  func.func @transform_5(%arg0: i32) -> (i32, i32) {
    %c0_i32 = arith.constant 0 : i32
    %c0_i32_0 = arith.constant 0 : i32
    return %arg0, %c0_i32 : i32, i32
  }
}

</mosaic_0001>

<llo_original>
// kernel: qnetwork_forward.1
$region0: #{qnetwork_forward.1}
  #allocation0 [shape = 'u32[]', space=smem, size = 0x4, offset = 0x4, fixed_abs, tag = 'smem constant byte address 0x4 - core index']
  #allocation1 [shape = 'u32[72,128]{1,0:T(1,128)}', space=vmem, size = 0x9000, scoped, tag = 'internal scratch']
  %s0 = inlined_call_operand.vmem [shape: f32[512,16], index: 0, kind: input, shape index: {}]
  %s1 = inlined_call_operand.vmem [shape: bf16[16,128], index: 1, kind: input, shape index: {}]
  %s2 = inlined_call_operand.vmem [shape: f32[1,128], index: 2, kind: input, shape index: {}]
  %s3 = inlined_call_operand.vmem [shape: f32[128,128], index: 3, kind: input, shape index: {}]
  %s4 = inlined_call_operand.vmem [shape: f32[1,128], index: 4, kind: input, shape index: {}]
  %s5 = inlined_call_operand.vmem [shape: f32[512,128], index: 5, kind: output, shape index: {}]
  %s6 = sld [smem:[#allocation0]]
  $region53: #{qnetwork_forward.1} parent=0
    _
  %s8 = ssub.s32 1, %s6
  %s9 = scalar_select 0, %s8, %s6
  loop: start=0, step=1, limit=4
  $region2: #{qnetwork_forward.1} parent=0 // loop_pre_header
    _
  $region3: #{qnetwork_forward.1} parent=0 // loop_header
    %s11 = sphi 0, %s15
    %p12 = scmp.ge.s32.totalorder %s11, 4
    %s21 = sphi 0, %s23
    %s24 = sphi 0, %s21
    %s25 = sphi 0, %s24
    %s41 = sphi 0, %s25
    %s45 = sphi 0, %s45
    %s47 = sphi 0, %s45
    %s48 = sphi 0, %s47
    %s62 = sphi 0, %s48
    %s66 = sphi 0, %s66
    %s68 = sphi 0, %s66
    %s69 = sphi 0, %s68
    %s83 = sphi 0, %s69
    %s87 = sphi 0, %s87
    %s89 = sphi 0, %s87
    %s90 = sphi 0, %s89
    %s104 = sphi 0, %s90
    %s108 = sphi 0, %s108
    %s110 = sphi 0, %s108
    %s111 = sphi 0, %s110
    %s125 = sphi 0, %s111
    %s131 = sphi 0, %s133
    %s134 = sphi 0, %s131
    %s135 = sphi 0, %s134
    %s151 = sphi 0, %s135
  $region4: #{qnetwork_forward.1} parent=0 // loop_header_branch
    %14 = sbr.rel (%p12) target = $region8
  $region5: #{qnetwork_forward.1} parent=0 // loop_body
    %s16 = ssub.s32 %s11, 1
    %s17 = ssub.s32 %s11, 2
    %s18 = sadd.s32 %s11, 1
    %s19 = ssub.s32 %s11, %s18
    %p20 = scmp.eq.s32.totalorder %s19, 0
    %s22 = sadd.s32 %s21, 1
    %s23 = scalar_select %p20, %s21, %s22
    %p26 = pneg %p20
    %p27 = scmp.eq.s32.totalorder %s11, 1
    %p28 = por %p26, %p27
    %p29 = scmp.ne.s32.totalorder %s21, %s24
    %p30 = scmp.eq.s32.totalorder %s11, 0
    %p31 = por %p29, %p30
    %p32 = scmp.ne.s32.totalorder %s21, %s24
    %p33 = scmp.eq.s32.totalorder %s16, 1
    %p34 = por %p32, %p33
    %p35 = scmp.ne.s32.totalorder %s24, %s25
    %p36 = scmp.eq.s32.totalorder %s16, 0
    %p37 = por %p35, %p36
    %p38 = scmp.ne.s32.totalorder %s24, %s25
    %p39 = scmp.eq.s32.totalorder %s17, 1
    %p40 = por %p38, %p39
    %p42 = scmp.ne.s32.totalorder %s25, %s41
    %p43 = scmp.eq.s32.totalorder %s17, 0
    %p44 = por %p42, %p43
    %s46 = sadd.s32 %s45, 1
    %p49 = scmp.eq.s32.totalorder %s11, 1
    %p50 = scmp.ne.s32.totalorder %s45, %s47
    %p51 = scmp.eq.s32.totalorder %s11, 0
    %p52 = por %p50, %p51
    %p53 = scmp.ne.s32.totalorder %s45, %s47
    %p54 = scmp.eq.s32.totalorder %s16, 1
    %p55 = por %p53, %p54
    %p56 = scmp.ne.s32.totalorder %s47, %s48
    %p57 = scmp.eq.s32.totalorder %s16, 0
    %p58 = por %p56, %p57
    %p59 = scmp.ne.s32.totalorder %s47, %s48
    %p60 = scmp.eq.s32.totalorder %s17, 1
    %p61 = por %p59, %p60
    %p63 = scmp.ne.s32.totalorder %s48, %s62
    %p64 = scmp.eq.s32.totalorder %s17, 0
    %p65 = por %p63, %p64
    %s67 = sadd.s32 %s66, 1
    %p70 = scmp.eq.s32.totalorder %s11, 1
    %p71 = scmp.ne.s32.totalorder %s66, %s68
    %p72 = scmp.eq.s32.totalorder %s11, 0
    %p73 = por %p71, %p72
    %p74 = scmp.ne.s32.totalorder %s66, %s68
    %p75 = scmp.eq.s32.totalorder %s16, 1
    %p76 = por %p74, %p75
    %p77 = scmp.ne.s32.totalorder %s68, %s69
    %p78 = scmp.eq.s32.totalorder %s16, 0
    %p79 = por %p77, %p78
    %p80 = scmp.ne.s32.totalorder %s68, %s69
    %p81 = scmp.eq.s32.totalorder %s17, 1
    %p82 = por %p80, %p81
    %p84 = scmp.ne.s32.totalorder %s69, %s83
    %p85 = scmp.eq.s32.totalorder %s17, 0
    %p86 = por %p84, %p85
    %s88 = sadd.s32 %s87, 1
    %p91 = scmp.eq.s32.totalorder %s11, 1
    %p92 = scmp.ne.s32.totalorder %s87, %s89
    %p93 = scmp.eq.s32.totalorder %s11, 0
    %p94 = por %p92, %p93
    %p95 = scmp.ne.s32.totalorder %s87, %s89
    %p96 = scmp.eq.s32.totalorder %s16, 1
    %p97 = por %p95, %p96
    %p98 = scmp.ne.s32.totalorder %s89, %s90
    %p99 = scmp.eq.s32.totalorder %s16, 0
    %p100 = por %p98, %p99
    %p101 = scmp.ne.s32.totalorder %s89, %s90
    %p102 = scmp.eq.s32.totalorder %s17, 1
    %p103 = por %p101, %p102
    %p105 = scmp.ne.s32.totalorder %s90, %s104
    %p106 = scmp.eq.s32.totalorder %s17, 0
    %p107 = por %p105, %p106
    %s109 = sadd.s32 %s108, 1
    %p112 = scmp.eq.s32.totalorder %s11, 1
    %p113 = scmp.ne.s32.totalorder %s108, %s110
    %p114 = scmp.eq.s32.totalorder %s11, 0
    %p115 = por %p113, %p114
    %p116 = scmp.ne.s32.totalorder %s108, %s110
    %p117 = scmp.eq.s32.totalorder %s16, 1
    %p118 = por %p116, %p117
    %p119 = scmp.ne.s32.totalorder %s110, %s111
    %p120 = scmp.eq.s32.totalorder %s16, 0
    %p121 = por %p119, %p120
    %p122 = scmp.ne.s32.totalorder %s110, %s111
    %p123 = scmp.eq.s32.totalorder %s17, 1
    %p124 = por %p122, %p123
    %p126 = scmp.ne.s32.totalorder %s111, %s125
    %p127 = scmp.eq.s32.totalorder %s17, 0
    %p128 = por %p126, %p127
    %s129 = ssub.s32 %s11, %s18
    %p130 = scmp.eq.s32.totalorder %s129, 0
    %s132 = sadd.s32 %s131, 1
    %s133 = scalar_select %p130, %s131, %s132
    %p136 = pneg %p130
    %p137 = scmp.eq.s32.totalorder %s11, 1
    %p138 = por %p136, %p137
    %p139 = scmp.ne.s32.totalorder %s131, %s134
    %p140 = scmp.eq.s32.totalorder %s11, 0
    %p141 = por %p139, %p140
    %p142 = scmp.ne.s32.totalorder %s131, %s134
    %p143 = scmp.eq.s32.totalorder %s16, 1
    %p144 = por %p142, %p143
    %p145 = scmp.ne.s32.totalorder %s134, %s135
    %p146 = scmp.eq.s32.totalorder %s16, 0
    %p147 = por %p145, %p146
    %p148 = scmp.ne.s32.totalorder %s134, %s135
    %p149 = scmp.eq.s32.totalorder %s17, 1
    %p150 = por %p148, %p149
    %p152 = scmp.ne.s32.totalorder %s135, %s151
    %p153 = scmp.eq.s32.totalorder %s17, 0
    %p154 = por %p152, %p153
    %p155 = scmp.le.s32.totalorder 1, %s11
    %p156 = scmp.lt.s32.totalorder %s11, 3
    %p157 = pnand %p155, %p156
    %p158 = pneg %p157
    // Predicated region
    $region9: #{qnetwork_forward.1} parent=5 // pred_check
      _
    $region10: #{qnetwork_forward.1} parent=5 // pred_check_branch
      %160 = sbr.rel (%p157) target = $region12
    $region11: #{qnetwork_forward.1} parent=5 // pred_region
      %s161 = ssub.s32 %s11, 1
      // Predicated region
      $region13: #{qnetwork_forward.1} parent=11 // pred_check
        %p162 = pneg %p58
      $region14: #{qnetwork_forward.1} parent=11 // pred_check_branch
        %164 = sbr.rel (%p162) target = $region16
      $region15: #{qnetwork_forward.1} parent=11 // pred_region
        _
      $region16: #{qnetwork_forward.1} parent=11 // pred_fallthru
        _
      // Predicated region
      $region17: #{qnetwork_forward.1} parent=11 // pred_check
        %p165 = pneg %p79
      $region18: #{qnetwork_forward.1} parent=11 // pred_check_branch
        %167 = sbr.rel (%p165) target = $region20
      $region19: #{qnetwork_forward.1} parent=11 // pred_region
        _
      $region20: #{qnetwork_forward.1} parent=11 // pred_fallthru
        _
      // Predicated region
      $region21: #{qnetwork_forward.1} parent=11 // pred_check
        %p168 = pneg %p100
      $region22: #{qnetwork_forward.1} parent=11 // pred_check_branch
        %170 = sbr.rel (%p168) target = $region24
      $region23: #{qnetwork_forward.1} parent=11 // pred_region
        _
      $region24: #{qnetwork_forward.1} parent=11 // pred_fallthru
        _
      // Predicated region
      $region25: #{qnetwork_forward.1} parent=11 // pred_check
        %p171 = pneg %p121
      $region26: #{qnetwork_forward.1} parent=11 // pred_check_branch
        %173 = sbr.rel (%p171) target = $region28
      $region27: #{qnetwork_forward.1} parent=11 // pred_region
        _
      $region28: #{qnetwork_forward.1} parent=11 // pred_fallthru
        _
    $region12: #{qnetwork_forward.1} parent=5 // pred_fallthru
      _
    %p174 = scmp.lt.s32.totalorder %s11, 2
    // Predicated region
    $region29: #{qnetwork_forward.1} parent=5 // pred_check
      %p175 = pneg %p174
    $region30: #{qnetwork_forward.1} parent=5 // pred_check_branch
      %177 = sbr.rel (%p175) target = $region32
    $region31: #{qnetwork_forward.1} parent=5 // pred_region
      // Predicated region
      $region33: #{qnetwork_forward.1} parent=31 // pred_check
        %p178 = pneg %p31
      $region34: #{qnetwork_forward.1} parent=31 // pred_check_branch
        %180 = sbr.rel (%p178) target = $region36
      $region35: #{qnetwork_forward.1} parent=31 // pred_region
        %s181 = smul.u32 32, %s11
        %p182 = scmp.lt.s32.totalorder %s181, 63
        %s183 = scalar_select %p182, %s181, 63
        %s184 = smul.addr %s183, 8
        %s185 = scalar_lea.vmem %s0, %s184
        %s186 = smul.u32 32, %s11
      $region36: #{qnetwork_forward.1} parent=31 // pred_fallthru
        _
    $region32: #{qnetwork_forward.1} parent=5 // pred_fallthru
      _
    %p187 = scmp.le.s32.totalorder 1, %s11
    %p188 = scmp.lt.s32.totalorder %s11, 3
    %p189 = pnand %p187, %p188
    %p190 = pneg %p189
    // Predicated region
    $region37: #{qnetwork_forward.1} parent=5 // pred_check
      _
    $region38: #{qnetwork_forward.1} parent=5 // pred_check_branch
      %192 = sbr.rel (%p189) target = $region40
    $region39: #{qnetwork_forward.1} parent=5 // pred_region
      %s193 = ssub.s32 %s11, 1
      %s194 = smul.u32 32, %s16
      %p195 = scmp.lt.s32.totalorder %s194, 63
      %s196 = scalar_select %p195, %s194, 63
      %s197 = smul.addr %s196, 8
      %s198 = scalar_lea.vmem %s0, %s197
      %p199 = pneg %p37
      %p200 = pneg %p34
      %p201 = pneg %p58
      %p202 = pneg %p55
      %p203 = pneg %p79
      %p204 = pneg %p76
      %p205 = pneg %p100
      %p206 = pneg %p97
      %p207 = pneg %p121
      %p208 = pneg %p118
      %p209 = pneg %p147
      %p210 = pneg %p144
      %s211 = smul.u32 32, %s16
      %p212 = scmp.lt.s32.totalorder %s211, 63
      %s213 = scalar_select %p212, %s211, 63
      %s214 = smul.addr %s213, 8
      %s215 = scalar_lea.vmem %s5, %s214
      %s216 = smul.u32 32, %s16
      %p217 = scmp.lt.s32.totalorder %s216, 63
      %s218 = scalar_select %p217, %s216, 63
      %s219 = smul.addr %s218, 8
      %s220 = scalar_lea.vmem %s0, %s219
      %s221 = smul.u32 32, %s16
      %s222 = smul.u32 32, %s16
      %p223 = scmp.lt.s32.totalorder %s222, 63
      %s224 = scalar_select %p223, %s222, 63
      %s225 = smul.addr %s224, 8
      %s226 = scalar_lea.vmem %s5, %s225
      %s227 = smul.u32 32, %s16
      %v229 = vld [vmem:[%s220] sm:$0xff]
      %v230 = vld [vmem:[%s220 + $0x8] sm:$0xff]
      %v231 = vld [vmem:[%s220 + $0x10] sm:$0xff]
      %v232 = vld [vmem:[%s220 + $0x18] sm:$0xff]
      %v233 = vld [vmem:[%s220 + $0x20] sm:$0xff]
      %v234 = vld [vmem:[%s220 + $0x28] sm:$0xff]
      %v235 = vld [vmem:[%s220 + $0x30] sm:$0xff]
      %v236 = vld [vmem:[%s220 + $0x38] sm:$0xff]
      %v237 = vld [vmem:[%s220 + $0x40] sm:$0xff]
      %v238 = vld [vmem:[%s220 + $0x48] sm:$0xff]
      %v239 = vld [vmem:[%s220 + $0x50] sm:$0xff]
      %v240 = vld [vmem:[%s220 + $0x58] sm:$0xff]
      %v241 = vld [vmem:[%s220 + $0x60] sm:$0xff]
      %v242 = vld [vmem:[%s220 + $0x68] sm:$0xff]
      %v243 = vld [vmem:[%s220 + $0x70] sm:$0xff]
      %v244 = vld [vmem:[%s220 + $0x78] sm:$0xff]
      %v245 = vld [vmem:[%s220 + $0x80] sm:$0xff]
      %v246 = vld [vmem:[%s220 + $0x88] sm:$0xff]
      %v247 = vld [vmem:[%s220 + $0x90] sm:$0xff]
      %v248 = vld [vmem:[%s220 + $0x98] sm:$0xff]
      %v249 = vld [vmem:[%s220 + $0xa0] sm:$0xff]
      %v250 = vld [vmem:[%s220 + $0xa8] sm:$0xff]
      %v251 = vld [vmem:[%s220 + $0xb0] sm:$0xff]
      %v252 = vld [vmem:[%s220 + $0xb8] sm:$0xff]
      %v253 = vld [vmem:[%s220 + $0xc0] sm:$0xff]
      %v254 = vld [vmem:[%s220 + $0xc8] sm:$0xff]
      %v255 = vld [vmem:[%s220 + $0xd0] sm:$0xff]
      %v256 = vld [vmem:[%s220 + $0xd8] sm:$0xff]
      %v257 = vld [vmem:[%s220 + $0xe0] sm:$0xff]
      %v258 = vld [vmem:[%s220 + $0xe8] sm:$0xff]
      %v259 = vld [vmem:[%s220 + $0xf0] sm:$0xff]
      %v260 = vld [vmem:[%s220 + $0xf8] sm:$0xff]
      %v261 = vpack.c.bf16 %v230, %v229
      %v262 = vpack.c.bf16 %v232, %v231
      %v263 = vpack.c.bf16 %v234, %v233
      %v264 = vpack.c.bf16 %v236, %v235
      %v265 = vpack.c.bf16 %v238, %v237
      %v266 = vpack.c.bf16 %v240, %v239
      %v267 = vpack.c.bf16 %v242, %v241
      %v268 = vpack.c.bf16 %v244, %v243
      %v269 = vpack.c.bf16 %v246, %v245
      %v270 = vpack.c.bf16 %v248, %v247
      %v271 = vpack.c.bf16 %v250, %v249
      %v272 = vpack.c.bf16 %v252, %v251
      %v273 = vpack.c.bf16 %v254, %v253
      %v274 = vpack.c.bf16 %v256, %v255
      %v275 = vpack.c.bf16 %v258, %v257
      %v276 = vpack.c.bf16 %v260, %v259
      %v277 = vld [vmem:[%s1] sm:$0xf]
      %v278 = vld [vmem:[%s1 + $0x4] sm:$0xf]
      %v279 = vld [vmem:[%s2] sm:$0x1]
      %v281 = vperm.slane %v279, 0
      %v285 = vunpack.c.l.b16 %v277
      %v286 = vunpack.c.l.b16 %v278
      %v287 = vpack.c.b16 %v286, %v285
      %vm289 = vcmask 130048
      %v291 = vsel %vm289, %v261, 0
      %v294 = vsel %vm289, %v262, 0
      %v297 = vsel %vm289, %v263, 0
      %v300 = vsel %vm289, %v264, 0
      %v303 = vsel %vm289, %v265, 0
      %v306 = vsel %vm289, %v266, 0
      %v309 = vsel %vm289, %v267, 0
      %v312 = vsel %vm289, %v268, 0
      %v315 = vsel %vm289, %v269, 0
      %v318 = vsel %vm289, %v270, 0
      %v321 = vsel %vm289, %v271, 0
      %v324 = vsel %vm289, %v272, 0
      %v327 = vsel %vm289, %v273, 0
      %v330 = vsel %vm289, %v274, 0
      %v333 = vsel %vm289, %v275, 0
      %v336 = vsel %vm289, %v276, 0
      %338 = vmatpush.bf16.msra.mxu0 0
      %339 = vmatpush.bf16.msra.mxu0 0
      %340 = vmatpush.bf16.msra.mxu0 0
      %341 = vmatpush.bf16.msra.mxu0 0
      %342 = vmatpush.bf16.msra.mxu0 0
      %343 = vmatpush.bf16.msra.mxu0 0
      %344 = vmatpush.bf16.msra.mxu0 0
      %345 = vmatpush.bf16.msra.mxu0 %v287
      %346 = vmatmul.bf16.gmra.mxu0 %v291
      %v347 = vpop.f32.mrf.mxu0
      %v348 = vadd.f32 %v281, %v347
      %v349 = vpop.f32.mrf.mxu0
      %v350 = vadd.f32 %v281, %v349
      %351 = vmatmul.bf16.gmra.mxu0 %v294
      %v352 = vpop.f32.mrf.mxu0
      %v353 = vadd.f32 %v281, %v352
      %v354 = vpop.f32.mrf.mxu0
      %v355 = vadd.f32 %v281, %v354
      %356 = vmatmul.bf16.gmra.mxu0 %v297
      %v357 = vpop.f32.mrf.mxu0
      %v358 = vadd.f32 %v281, %v357
      %v359 = vpop.f32.mrf.mxu0
      %v360 = vadd.f32 %v281, %v359
      %361 = vmatmul.bf16.gmra.mxu0 %v300
      %v362 = vpop.f32.mrf.mxu0
      %v363 = vadd.f32 %v281, %v362
      %v364 = vpop.f32.mrf.mxu0
      %v365 = vadd.f32 %v281, %v364
      %366 = vmatmul.bf16.gmra.mxu0 %v303
      %v367 = vpop.f32.mrf.mxu0
      %v368 = vadd.f32 %v281, %v367
      %v369 = vpop.f32.mrf.mxu0
      %v370 = vadd.f32 %v281, %v369
      %371 = vmatmul.bf16.gmra.mxu0 %v306
      %v372 = vpop.f32.mrf.mxu0
      %v373 = vadd.f32 %v281, %v372
      %v374 = vpop.f32.mrf.mxu0
      %v375 = vadd.f32 %v281, %v374
      %376 = vmatmul.bf16.gmra.mxu0 %v309
      %v377 = vpop.f32.mrf.mxu0
      %v378 = vadd.f32 %v281, %v377
      %v379 = vpop.f32.mrf.mxu0
      %v380 = vadd.f32 %v281, %v379
      %381 = vmatmul.bf16.gmra.mxu0 %v312
      %v382 = vpop.f32.mrf.mxu0
      %v383 = vadd.f32 %v281, %v382
      %v384 = vpop.f32.mrf.mxu0
      %v385 = vadd.f32 %v281, %v384
      %386 = vmatmul.bf16.gmra.mxu0 %v315
      %v387 = vpop.f32.mrf.mxu0
      %v388 = vadd.f32 %v281, %v387
      %v389 = vpop.f32.mrf.mxu0
      %v390 = vadd.f32 %v281, %v389
      %391 = vmatmul.bf16.gmra.mxu0 %v318
      %v392 = vpop.f32.mrf.mxu0
      %v393 = vadd.f32 %v281, %v392
      %v394 = vpop.f32.mrf.mxu0
      %v395 = vadd.f32 %v281, %v394
      %396 = vmatmul.bf16.gmra.mxu0 %v321
      %v397 = vpop.f32.mrf.mxu0
      %v398 = vadd.f32 %v281, %v397
      %v399 = vpop.f32.mrf.mxu0
      %v400 = vadd.f32 %v281, %v399
      %401 = vmatmul.bf16.gmra.mxu0 %v324
      %v402 = vpop.f32.mrf.mxu0
      %v403 = vadd.f32 %v281, %v402
      %v404 = vpop.f32.mrf.mxu0
      %v405 = vadd.f32 %v281, %v404
      %406 = vmatmul.bf16.gmra.mxu0 %v327
      %v407 = vpop.f32.mrf.mxu0
      %v408 = vadd.f32 %v281, %v407
      %v409 = vpop.f32.mrf.mxu0
      %v410 = vadd.f32 %v281, %v409
      %411 = vmatmul.bf16.gmra.mxu0 %v330
      %v412 = vpop.f32.mrf.mxu0
      %v413 = vadd.f32 %v281, %v412
      %v414 = vpop.f32.mrf.mxu0
      %v415 = vadd.f32 %v281, %v414
      %416 = vmatmul.bf16.gmra.mxu0 %v333
      %v417 = vpop.f32.mrf.mxu0
      %v418 = vadd.f32 %v281, %v417
      %v419 = vpop.f32.mrf.mxu0
      %v420 = vadd.f32 %v281, %v419
      %421 = vmatmul.bf16.gmra.mxu0 %v336
      %v422 = vpop.f32.mrf.mxu0
      %v423 = vadd.f32 %v281, %v422
      %v424 = vpop.f32.mrf.mxu0
      %v425 = vadd.f32 %v281, %v424
      %426 = vdwg.mxu0
      %v427 = vmul.f32 %v348, 0.01
      %v428 = vmul.f32 %v350, 0.01
      %v429 = vmul.f32 %v353, 0.01
      %v430 = vmul.f32 %v355, 0.01
      %v431 = vmul.f32 %v358, 0.01
      %v432 = vmul.f32 %v360, 0.01
      %v433 = vmul.f32 %v363, 0.01
      %v434 = vmul.f32 %v365, 0.01
      %v435 = vmul.f32 %v368, 0.01
      %v436 = vmul.f32 %v370, 0.01
      %v437 = vmul.f32 %v373, 0.01
      %v438 = vmul.f32 %v375, 0.01
      %v439 = vmul.f32 %v378, 0.01
      %v440 = vmul.f32 %v380, 0.01
      %v441 = vmul.f32 %v383, 0.01
      %v442 = vmul.f32 %v385, 0.01
      %v443 = vmul.f32 %v388, 0.01
      %v444 = vmul.f32 %v390, 0.01
      %v445 = vmul.f32 %v393, 0.01
      %v446 = vmul.f32 %v395, 0.01
      %v447 = vmul.f32 %v398, 0.01
      %v448 = vmul.f32 %v400, 0.01
      %v449 = vmul.f32 %v403, 0.01
      %v450 = vmul.f32 %v405, 0.01
      %v451 = vmul.f32 %v408, 0.01
      %v452 = vmul.f32 %v410, 0.01
      %v453 = vmul.f32 %v413, 0.01
      %v454 = vmul.f32 %v415, 0.01
      %v455 = vmul.f32 %v418, 0.01
      %v456 = vmul.f32 %v420, 0.01
      %v457 = vmul.f32 %v423, 0.01
      %v458 = vmul.f32 %v425, 0.01
      %v459 = vmax.f32 %v348, %v427
      %v460 = vmax.f32 %v350, %v428
      %v461 = vmax.f32 %v353, %v429
      %v462 = vmax.f32 %v355, %v430
      %v463 = vmax.f32 %v358, %v431
      %v464 = vmax.f32 %v360, %v432
      %v465 = vmax.f32 %v363, %v433
      %v466 = vmax.f32 %v365, %v434
      %v467 = vmax.f32 %v368, %v435
      %v468 = vmax.f32 %v370, %v436
      %v469 = vmax.f32 %v373, %v437
      %v470 = vmax.f32 %v375, %v438
      %v471 = vmax.f32 %v378, %v439
      %v472 = vmax.f32 %v380, %v440
      %v473 = vmax.f32 %v383, %v441
      %v474 = vmax.f32 %v385, %v442
      %v475 = vmax.f32 %v388, %v443
      %v476 = vmax.f32 %v390, %v444
      %v477 = vmax.f32 %v393, %v445
      %v478 = vmax.f32 %v395, %v446
      %v479 = vmax.f32 %v398, %v447
      %v480 = vmax.f32 %v400, %v448
      %v481 = vmax.f32 %v403, %v449
      %v482 = vmax.f32 %v405, %v450
      %v483 = vmax.f32 %v408, %v451
      %v484 = vmax.f32 %v410, %v452
      %v485 = vmax.f32 %v413, %v453
      %v486 = vmax.f32 %v415, %v454
      %v487 = vmax.f32 %v418, %v455
      %v488 = vmax.f32 %v420, %v456
      %v489 = vmax.f32 %v423, %v457
      %v490 = vmax.f32 %v425, %v458
      %v491 = vld [vmem:[%s3] sm:$0xff]
      %v492 = vld [vmem:[%s3 + $0x8] sm:$0xff]
      %v493 = vld [vmem:[%s3 + $0x10] sm:$0xff]
      %v494 = vld [vmem:[%s3 + $0x18] sm:$0xff]
      %v495 = vld [vmem:[%s3 + $0x20] sm:$0xff]
      %v496 = vld [vmem:[%s3 + $0x28] sm:$0xff]
      %v497 = vld [vmem:[%s3 + $0x30] sm:$0xff]
      %v498 = vld [vmem:[%s3 + $0x38] sm:$0xff]
      %v499 = vld [vmem:[%s3 + $0x40] sm:$0xff]
      %v500 = vld [vmem:[%s3 + $0x48] sm:$0xff]
      %v501 = vld [vmem:[%s3 + $0x50] sm:$0xff]
      %v502 = vld [vmem:[%s3 + $0x58] sm:$0xff]
      %v503 = vld [vmem:[%s3 + $0x60] sm:$0xff]
      %v504 = vld [vmem:[%s3 + $0x68] sm:$0xff]
      %v505 = vld [vmem:[%s3 + $0x70] sm:$0xff]
      %v506 = vld [vmem:[%s3 + $0x78] sm:$0xff]
      %v507 = vld [vmem:[%s4] sm:$0x1]
      %v509 = vperm.slane %v507, 0
      %511 = vmatpush.msra.mxu0 %v506
      %512 = vmatpush.msra.mxu0 %v505
      %513 = vmatpush.msra.mxu0 %v504
      %514 = vmatpush.msra.mxu0 %v503
      %515 = vmatpush.msra.mxu0 %v502
      %516 = vmatpush.msra.mxu0 %v501
      %517 = vmatpush.msra.mxu0 %v500
      %518 = vmatpush.msra.mxu0 %v499
      %519 = vmatpush.msra.mxu0 %v498
      %520 = vmatpush.msra.mxu0 %v497
      %521 = vmatpush.msra.mxu0 %v496
      %522 = vmatpush.msra.mxu0 %v495
      %523 = vmatpush.msra.mxu0 %v494
      %524 = vmatpush.msra.mxu0 %v493
      %525 = vmatpush.msra.mxu0 %v492
      %526 = vmatpush.msra.mxu0 %v491
      %527 = vmatmul.f32.gmra.mxu0 %v459
      %v528 = vpop.f32.mrf.mxu0
      %v529 = vadd.f32 %v509, %v528
      %530 = vmatmul.f32.gmra.mxu0 %v460
      %v531 = vpop.f32.mrf.mxu0
      %v532 = vadd.f32 %v509, %v531
      %533 = vmatmul.f32.gmra.mxu0 %v461
      %v534 = vpop.f32.mrf.mxu0
      %v535 = vadd.f32 %v509, %v534
      %536 = vmatmul.f32.gmra.mxu0 %v462
      %v537 = vpop.f32.mrf.mxu0
      %v538 = vadd.f32 %v509, %v537
      %539 = vmatmul.f32.gmra.mxu0 %v463
      %v540 = vpop.f32.mrf.mxu0
      %v541 = vadd.f32 %v509, %v540
      %542 = vmatmul.f32.gmra.mxu0 %v464
      %v543 = vpop.f32.mrf.mxu0
      %v544 = vadd.f32 %v509, %v543
      %545 = vmatmul.f32.gmra.mxu0 %v465
      %v546 = vpop.f32.mrf.mxu0
      %v547 = vadd.f32 %v509, %v546
      %548 = vmatmul.f32.gmra.mxu0 %v466
      %v549 = vpop.f32.mrf.mxu0
      %v550 = vadd.f32 %v509, %v549
      %551 = vmatmul.f32.gmra.mxu0 %v467
      %v552 = vpop.f32.mrf.mxu0
      %v553 = vadd.f32 %v509, %v552
      %554 = vmatmul.f32.gmra.mxu0 %v468
      %v555 = vpop.f32.mrf.mxu0
      %v556 = vadd.f32 %v509, %v555
      %557 = vmatmul.f32.gmra.mxu0 %v469
      %v558 = vpop.f32.mrf.mxu0
      %v559 = vadd.f32 %v509, %v558
      %560 = vmatmul.f32.gmra.mxu0 %v470
      %v561 = vpop.f32.mrf.mxu0
      %v562 = vadd.f32 %v509, %v561
      %563 = vmatmul.f32.gmra.mxu0 %v471
      %v564 = vpop.f32.mrf.mxu0
      %v565 = vadd.f32 %v509, %v564
      %566 = vmatmul.f32.gmra.mxu0 %v472
      %v567 = vpop.f32.mrf.mxu0
      %v568 = vadd.f32 %v509, %v567
      %569 = vmatmul.f32.gmra.mxu0 %v473
      %v570 = vpop.f32.mrf.mxu0
      %v571 = vadd.f32 %v509, %v570
      %572 = vmatmul.f32.gmra.mxu0 %v474
      %v573 = vpop.f32.mrf.mxu0
      %v574 = vadd.f32 %v509, %v573
      %575 = vmatmul.f32.gmra.mxu0 %v475
      %v576 = vpop.f32.mrf.mxu0
      %v577 = vadd.f32 %v509, %v576
      %578 = vmatmul.f32.gmra.mxu0 %v476
      %v579 = vpop.f32.mrf.mxu0
      %v580 = vadd.f32 %v509, %v579
      %581 = vmatmul.f32.gmra.mxu0 %v477
      %v582 = vpop.f32.mrf.mxu0
      %v583 = vadd.f32 %v509, %v582
      %584 = vmatmul.f32.gmra.mxu0 %v478
      %v585 = vpop.f32.mrf.mxu0
      %v586 = vadd.f32 %v509, %v585
      %587 = vmatmul.f32.gmra.mxu0 %v479
      %v588 = vpop.f32.mrf.mxu0
      %v589 = vadd.f32 %v509, %v588
      %590 = vmatmul.f32.gmra.mxu0 %v480
      %v591 = vpop.f32.mrf.mxu0
      %v592 = vadd.f32 %v509, %v591
      %593 = vmatmul.f32.gmra.mxu0 %v481
      %v594 = vpop.f32.mrf.mxu0
      %v595 = vadd.f32 %v509, %v594
      %596 = vmatmul.f32.gmra.mxu0 %v482
      %v597 = vpop.f32.mrf.mxu0
      %v598 = vadd.f32 %v509, %v597
      %599 = vmatmul.f32.gmra.mxu0 %v483
      %v600 = vpop.f32.mrf.mxu0
      %v601 = vadd.f32 %v509, %v600
      %602 = vmatmul.f32.gmra.mxu0 %v484
      %v603 = vpop.f32.mrf.mxu0
      %v604 = vadd.f32 %v509, %v603
      %605 = vmatmul.f32.gmra.mxu0 %v485
      %v606 = vpop.f32.mrf.mxu0
      %v607 = vadd.f32 %v509, %v606
      %608 = vmatmul.f32.gmra.mxu0 %v486
      %v609 = vpop.f32.mrf.mxu0
      %v610 = vadd.f32 %v509, %v609
      %611 = vmatmul.f32.gmra.mxu0 %v487
      %v612 = vpop.f32.mrf.mxu0
      %v613 = vadd.f32 %v509, %v612
      %614 = vmatmul.f32.gmra.mxu0 %v488
      %v615 = vpop.f32.mrf.mxu0
      %v616 = vadd.f32 %v509, %v615
      %617 = vmatmul.f32.gmra.mxu0 %v489
      %v618 = vpop.f32.mrf.mxu0
      %v619 = vadd.f32 %v509, %v618
      %620 = vmatmul.f32.gmra.mxu0 %v490
      %v621 = vpop.f32.mrf.mxu0
      %v622 = vadd.f32 %v509, %v621
      %623 = vdwg.mxu0
      %624 = vst [vmem:[%s226] sm:$0xff] %v529
      %625 = vst [vmem:[%s226 + $0x8] sm:$0xff] %v532
      %626 = vst [vmem:[%s226 + $0x10] sm:$0xff] %v535
      %627 = vst [vmem:[%s226 + $0x18] sm:$0xff] %v538
      %628 = vst [vmem:[%s226 + $0x20] sm:$0xff] %v541
      %629 = vst [vmem:[%s226 + $0x28] sm:$0xff] %v544
      %630 = vst [vmem:[%s226 + $0x30] sm:$0xff] %v547
      %631 = vst [vmem:[%s226 + $0x38] sm:$0xff] %v550
      %632 = vst [vmem:[%s226 + $0x40] sm:$0xff] %v553
      %633 = vst [vmem:[%s226 + $0x48] sm:$0xff] %v556
      %634 = vst [vmem:[%s226 + $0x50] sm:$0xff] %v559
      %635 = vst [vmem:[%s226 + $0x58] sm:$0xff] %v562
      %636 = vst [vmem:[%s226 + $0x60] sm:$0xff] %v565
      %637 = vst [vmem:[%s226 + $0x68] sm:$0xff] %v568
      %638 = vst [vmem:[%s226 + $0x70] sm:$0xff] %v571
      %639 = vst [vmem:[%s226 + $0x78] sm:$0xff] %v574
      %640 = vst [vmem:[%s226 + $0x80] sm:$0xff] %v577
      %641 = vst [vmem:[%s226 + $0x88] sm:$0xff] %v580
      %642 = vst [vmem:[%s226 + $0x90] sm:$0xff] %v583
      %643 = vst [vmem:[%s226 + $0x98] sm:$0xff] %v586
      %644 = vst [vmem:[%s226 + $0xa0] sm:$0xff] %v589
      %645 = vst [vmem:[%s226 + $0xa8] sm:$0xff] %v592
      %646 = vst [vmem:[%s226 + $0xb0] sm:$0xff] %v595
      %647 = vst [vmem:[%s226 + $0xb8] sm:$0xff] %v598
      %648 = vst [vmem:[%s226 + $0xc0] sm:$0xff] %v601
      %649 = vst [vmem:[%s226 + $0xc8] sm:$0xff] %v604
      %650 = vst [vmem:[%s226 + $0xd0] sm:$0xff] %v607
      %651 = vst [vmem:[%s226 + $0xd8] sm:$0xff] %v610
      %652 = vst [vmem:[%s226 + $0xe0] sm:$0xff] %v613
      %653 = vst [vmem:[%s226 + $0xe8] sm:$0xff] %v616
      %654 = vst [vmem:[%s226 + $0xf0] sm:$0xff] %v619
      %655 = vst [vmem:[%s226 + $0xf8] sm:$0xff] %v622
      %s656 = smul.u32 32, %s16
      %p657 = scmp.lt.s32.totalorder %s656, 63
      %s658 = scalar_select %p657, %s656, 63
      %s659 = smul.addr %s658, 8
      %s660 = scalar_lea.vmem %s5, %s659
      // Predicated region
      $region41: #{qnetwork_forward.1} parent=39 // pred_check
        %p661 = pneg %p144
      $region42: #{qnetwork_forward.1} parent=39 // pred_check_branch
        %663 = sbr.rel (%p661) target = $region44
      $region43: #{qnetwork_forward.1} parent=39 // pred_region
        %s664 = smul.u32 32, %s16
      $region44: #{qnetwork_forward.1} parent=39 // pred_fallthru
        _
    $region40: #{qnetwork_forward.1} parent=5 // pred_fallthru
      _
    %p665 = scmp.le.s32.totalorder 2, %s11
    // Predicated region
    $region45: #{qnetwork_forward.1} parent=5 // pred_check
      %p666 = pneg %p665
    $region46: #{qnetwork_forward.1} parent=5 // pred_check_branch
      %668 = sbr.rel (%p666) target = $region48
    $region47: #{qnetwork_forward.1} parent=5 // pred_region
      %s669 = ssub.s32 %s11, 2
      // Predicated region
      $region49: #{qnetwork_forward.1} parent=47 // pred_check
        %p670 = pneg %p150
      $region50: #{qnetwork_forward.1} parent=47 // pred_check_branch
        %672 = sbr.rel (%p670) target = $region52
      $region51: #{qnetwork_forward.1} parent=47 // pred_region
        %s673 = smul.u32 32, %s17
        %p674 = scmp.lt.s32.totalorder %s673, 63
        %s675 = scalar_select %p674, %s673, 63
        %s676 = smul.addr %s675, 8
        %s677 = scalar_lea.vmem %s5, %s676
      $region52: #{qnetwork_forward.1} parent=47 // pred_fallthru
        _
    $region48: #{qnetwork_forward.1} parent=5 // pred_fallthru
      _
  $region6: #{qnetwork_forward.1} parent=0 // loop_footer
    %s15 = sadd.s32 1, %s11
  $region7: #{qnetwork_forward.1} parent=0 // loop_footer_branch
    %10 = sbr.rel target = $region3
  $region8: #{qnetwork_forward.1} parent=0 // loop_exit
    _

</llo_original>
